<compile_context>
chip_gen: v5e
topology: v5e:2x2
jax: 0.10.0
libtpu: 0.0.40
codegen_flags: <defaults>
</compile_context>

<pallas_src>
import functools

import jax
import jax.numpy as jnp
from jax.experimental import pallas as pl
from jax.experimental.pallas import tpu as pltpu


# -----------------------------------------------------------------------------
# Kernel 1: fused (depthwise conv + BN + 1x1 pointwise conv) == one matmul,
# channels-major layout so stores are lane-dense along the token axis.
# -----------------------------------------------------------------------------
def _token_proj_kernel(p_ref, w_ref, b_ref, o_ref):
    # p_ref : (1, KK*C, T) bf16    w_ref : (Cout, KK*C) bf16
    # b_ref : (Cout, 1)    f32     o_ref : (1, Cout, T)
    acc = jnp.dot(w_ref[...], p_ref[0], preferred_element_type=jnp.float32)
    o_ref[0] = (acc + b_ref[...]).astype(o_ref.dtype)


def fused_token_projection(patches_t, w_fused_t, bias_col, out_dtype):
    """(Cout, KK*C) @ (B, KK*C, HW) + bias -> (B, Cout, HW)."""
    B, KKC, HW = patches_t.shape
    Cout = w_fused_t.shape[0]
    # Lane-axis (token) tile: full extent when small, else 1024 (multiple of 128).
    # TODO(synk): derive the cap from pltpu.get_tpu_info() so v7x's 64 MiB VMEM
    # gets a smaller tile while v5e/v6e keep 1024+.
    T = HW if HW <= 1024 else 1024
    grid = (B, pl.cdiv(HW, T))
    return pl.pallas_call(
        _token_proj_kernel,
        out_shape=jax.ShapeDtypeStruct((B, Cout, HW), out_dtype),
        grid=grid,
        in_specs=[
            pl.BlockSpec((1, KKC, T), lambda b, t: (b, 0, t)),
            # TODO(synk): pipeline_mode=pl.Buffered(1) on the two grid-invariant
            # operands below to halve their VMEM footprint on v7x.
            pl.BlockSpec((Cout, KKC), lambda b, t: (0, 0)),
            pl.BlockSpec((Cout, 1), lambda b, t: (0, 0)),
        ],
        out_specs=pl.BlockSpec((1, Cout, T), lambda b, t: (b, 0, t)),
        compiler_params=pltpu.CompilerParams(
            dimension_semantics=("parallel", "parallel")),
    )(patches_t, w_fused_t, bias_col)


# -----------------------------------------------------------------------------
# Kernel 2: attention (all heads per step) + fused output 1x1 projection.
# Everything is computed transposed: lanes carry the query-token axis, so the
# output block (1, dim, Tq) is lane-dense and already channels-major (NCHW).
# -----------------------------------------------------------------------------
def _attn_out_kernel(qt_ref, k_ref, vt_ref, wt_ref, b_ref, o_ref, *,
                     heads, dim_head):
    # qt_ref : (1, inner, Tq)        bf16   (softmax scale folded into weights)
    # k_ref  : (1, heads, Nkv, dh)   bf16
    # vt_ref : (1, heads, dh, Nkv)   bf16
    # wt_ref : (dim, inner)          bf16
    # b_ref  : (dim, 1)              f32
    # o_ref  : (1, dim, Tq)
    qt = qt_ref[0]                                   # (inner, Tq)

    # TODO(synk): for large seq lengths add KV tiling + online softmax (kv grid
    # axis "arbitrary", m/l/ctx in VMEM scratch) so the KV block stays bounded
    # on v7x's 64 MiB VMEM.
    # TODO(synk): for heads >= 6 switch this static loop to lax.fori_loop writing
    # into a (inner, Tq) VMEM scratch to bound vreg live ranges.
    ctx_ts = []
    for h in range(heads):
        s = h * dim_head
        qh_t = qt[s:s + dim_head, :]                 # (dh, Tq)  sublane slice
        kh = k_ref[0, h]                             # (Nkv, dh)
        vh_t = vt_ref[0, h]                          # (dh, Nkv)

        # scores^T = K @ Q^T : plain MXU matmul, no in-kernel transposes.
        dots_t = jnp.dot(kh, qh_t, preferred_element_type=jnp.float32)  # (Nkv, Tq)
        dots_t = dots_t - jnp.max(dots_t, axis=0, keepdims=True)        # stable
        e_t = jnp.exp(dots_t)                                           # (Nkv, Tq)
        denom = jnp.sum(e_t, axis=0, keepdims=True)                     # (1, Tq)

        # ctx^T = V^T @ e^T, normalization deferred to the (dh, Tq) context.
        ctx_t = jnp.dot(vh_t, e_t.astype(vh_t.dtype),
                        preferred_element_type=jnp.float32)             # (dh, Tq)
        ctx_ts.append(ctx_t * pl.reciprocal(denom, approx=True))

    ctx_all_t = jnp.concatenate(ctx_ts, axis=0)                         # (inner, Tq)
    # Single full-contraction-depth output projection (K = inner).
    out_t = jnp.dot(wt_ref[...], ctx_all_t.astype(wt_ref.dtype),
                    preferred_element_type=jnp.float32)                 # (dim, Tq)
    o_ref[0] = (out_t + b_ref[...]).astype(o_ref.dtype)


def attention_block(q_t, k_h, v_t_h, out_wt, out_b_col, heads, dim_head, out_dtype):
    B, inner, Nq = q_t.shape
    Nkv = k_h.shape[2]
    dim = out_wt.shape[0]
    Tq = Nq if Nq <= 1024 else 1024                  # lane axis: mult of 128 if tiled
    grid = (B, pl.cdiv(Nq, Tq))
    kernel = functools.partial(_attn_out_kernel, heads=heads, dim_head=dim_head)
    return pl.pallas_call(
        kernel,
        out_shape=jax.ShapeDtypeStruct((B, dim, Nq), out_dtype),
        grid=grid,
        in_specs=[
            pl.BlockSpec((1, inner, Tq), lambda b, t: (b, 0, t)),
            pl.BlockSpec((1, heads, Nkv, dim_head), lambda b, t: (b, 0, 0, 0)),
            pl.BlockSpec((1, heads, dim_head, Nkv), lambda b, t: (b, 0, 0, 0)),
            pl.BlockSpec((dim, inner), lambda b, t: (0, 0)),
            pl.BlockSpec((dim, 1), lambda b, t: (0, 0)),
        ],
        out_specs=pl.BlockSpec((1, dim, Tq), lambda b, t: (b, 0, t)),
        compiler_params=pltpu.CompilerParams(
            dimension_semantics=("parallel", "parallel")),
    )(q_t, k_h, v_t_h, out_wt, out_b_col)


# -----------------------------------------------------------------------------
# JAX glue: channels-major im2col (straight from NCHW, no transpose), weight fold
# -----------------------------------------------------------------------------
def _im2col_t(x_nchw, kernel_size, stride, padding):
    """Shifted taps concatenated along channels -> (B, KK*C, Ho*Wo)."""
    B, C, H, W = x_nchw.shape
    xp = jnp.pad(x_nchw, ((0, 0), (0, 0), (padding, padding), (padding, padding)))
    Ho = (H + 2 * padding - kernel_size) // stride + 1
    Wo = (W + 2 * padding - kernel_size) // stride + 1
    slabs = []
    for ki in range(kernel_size):
        for kj in range(kernel_size):
            slabs.append(xp[:, :, ki:ki + stride * Ho:stride,
                            kj:kj + stride * Wo:stride])
    # TODO(synk): for very large activations build the taps from a halo'd VMEM
    # tile inside the kernel to avoid the KK-times im2col blowup in HBM.
    patches = jnp.concatenate(slabs, axis=1).reshape(
        B, kernel_size * kernel_size * C, Ho * Wo)
    return patches, Ho, Wo


def _fold_dw_bn_pw(dw, bn_scale, bn_shift, pw, extra_scale=1.0):
    """Fold depthwise weights + BN (+ optional scalar) into a (KK*C, Cout) matmul."""
    KK, C = dw.shape
    Cout = pw.shape[1]
    w = (dw * bn_scale[None, :])[:, :, None] * pw[None, :, :]    # (KK, C, Cout)
    w = w.reshape(KK * C, Cout) * extra_scale
    b = (bn_shift @ pw) * extra_scale                            # (Cout,)
    return w, b


# -----------------------------------------------------------------------------
# Full Attention forward
# -----------------------------------------------------------------------------
def attention_forward(x_nchw, params, *, heads, dim_head, proj_kernel, kv_proj_stride):
    B, C, H, W = x_nchw.shape
    inner = heads * dim_head
    scale = dim_head ** (-0.5)
    pad = proj_kernel // 2
    dim = params["out_w"].shape[1]
    cdt = jnp.bfloat16   # MXU operand dtype (f32 accumulation everywhere)

    # Fold depthwise + BN (+ softmax scale on q) into single matmul weights.
    wq, bq = _fold_dw_bn_pw(params["q_dw"], params["q_bn_scale"],
                            params["q_bn_shift"], params["q_pw"],
                            extra_scale=scale)
    wkv, bkv = _fold_dw_bn_pw(params["kv_dw"], params["kv_bn_scale"],
                              params["kv_bn_shift"], params["kv_pw"])

    # bf16 before im2col: half the HBM bytes of the KK-times patch stream, and no
    # second bf16 copy afterwards.
    x_bf = x_nchw.astype(cdt)
    pq_t, Hq, Wq = _im2col_t(x_bf, proj_kernel, 1, pad)            # (B, KK*C, Nq)
    pkv_t, Hk, Wk = _im2col_t(x_bf, proj_kernel, kv_proj_stride, pad)

    q_t = fused_token_projection(pq_t, wq.T.astype(cdt),
                                 bq.reshape(inner, 1).astype(jnp.float32), cdt)
    kv_t = fused_token_projection(pkv_t, wkv.T.astype(cdt),
                                  bkv.reshape(2 * inner, 1).astype(jnp.float32), cdt)

    Nkv = Hk * Wk
    # K per head as (B, heads, Nkv, dh): natural MXU LHS for K @ Q^T (small tensor,
    # cheap wrapper transpose).  V per head as (B, heads, dh, Nkv): pure reshape of
    # the channels-major kv tokens, no transpose at all.
    k_h = (kv_t[:, :inner, :].reshape(B, heads, dim_head, Nkv)
           .transpose(0, 1, 3, 2))
    v_t_h = kv_t[:, inner:, :].reshape(B, heads, dim_head, Nkv)

    y = attention_block(q_t, k_h, v_t_h,
                        params["out_w"].T.astype(cdt),
                        params["out_b"].reshape(dim, 1).astype(jnp.float32),
                        heads, dim_head, x_nchw.dtype)             # (B, dim, Nq)
    # nn.Dropout(p=0.0) is identity; output is already channels-major -> free reshape.
    return y.reshape(B, dim, Hq, Wq)


# -----------------------------------------------------------------------------
# Deterministic parameter initialization (synthetic, no checkpoint load)
# -----------------------------------------------------------------------------
def init_params(dim, heads, dim_head, proj_kernel):
    inner = heads * dim_head
    KK = proj_kernel * proj_kernel
    keys = jax.random.split(jax.random.PRNGKey(42), 12)

    def bn(kg, kb, km, kv, c):
        gamma = 1.0 + 0.1 * jax.random.normal(kg, (c,), jnp.float32)
        beta = 0.1 * jax.random.normal(kb, (c,), jnp.float32)
        mean = 0.1 * jax.random.normal(km, (c,), jnp.float32)
        var = 0.9 + 0.1 * jnp.abs(jax.random.normal(kv, (c,), jnp.float32))
        scl = gamma / jnp.sqrt(var + 1e-5)
        return scl, beta - mean * scl

    q_bn_scale, q_bn_shift = bn(keys[2], keys[3], keys[4], keys[5], dim)
    kv_bn_scale, kv_bn_shift = bn(keys[6], keys[7], keys[8], keys[9], dim)
    return {
        "q_dw": 0.2 * jax.random.normal(keys[0], (KK, dim), jnp.float32),
        "q_pw": 0.2 * jax.random.normal(keys[1], (dim, inner), jnp.float32),
        "q_bn_scale": q_bn_scale, "q_bn_shift": q_bn_shift,
        "kv_dw": 0.2 * jax.random.normal(keys[10], (KK, dim), jnp.float32),
        "kv_pw": 0.2 * jax.random.normal(keys[11], (dim, 2 * inner), jnp.float32),
        "kv_bn_scale": kv_bn_scale, "kv_bn_shift": kv_bn_shift,
        "out_w": 0.2 * jax.random.normal(jax.random.PRNGKey(7), (inner, dim), jnp.float32),
        "out_b": 0.05 * jax.random.normal(jax.random.PRNGKey(8), (dim,), jnp.float32),
    }


# -----------------------------------------------------------------------------
# Pure-JAX f32 reference (for correctness check)
# -----------------------------------------------------------------------------
def _ref_dw_block(x, dw, bn_scale, bn_shift, pw, *, k, stride, pad):
    C = x.shape[1]
    w_dw = dw.T.reshape(C, k, k)[:, None, :, :]                   # (C,1,k,k) OIHW
    y = jax.lax.conv_general_dilated(
        x, w_dw, (stride, stride), [(pad, pad), (pad, pad)],
        feature_group_count=C, dimension_numbers=("NCHW", "OIHW", "NCHW"))
    y = y * bn_scale[None, :, None, None] + bn_shift[None, :, None, None]
    return jnp.einsum("bchw,co->bohw", y, pw)


def ref_forward(x, params, *, heads, dim_head, proj_kernel, kv_proj_stride):
    B = x.shape[0]
    inner = heads * dim_head
    pad = proj_kernel // 2
    q = _ref_dw_block(x, params["q_dw"], params["q_bn_scale"], params["q_bn_shift"],
                      params["q_pw"], k=proj_kernel, stride=1, pad=pad)
    kv = _ref_dw_block(x, params["kv_dw"], params["kv_bn_scale"], params["kv_bn_shift"],
                       params["kv_pw"], k=proj_kernel, stride=kv_proj_stride, pad=pad)
    k_, v_ = kv[:, :inner], kv[:, inner:]

    def rearr(t):  # 'b (h d) x y -> (b h) (x y) d'
        b, _, hh, ww = t.shape
        return (t.reshape(b, heads, dim_head, hh * ww)
                 .transpose(0, 1, 3, 2)
                 .reshape(b * heads, hh * ww, dim_head))

    qq, kk, vv = rearr(q), rearr(k_), rearr(v_)
    dots = jnp.einsum("bid,bjd->bij", qq, kk) * (dim_head ** -0.5)
    attn = jax.nn.softmax(dots, axis=-1)
    o = jnp.einsum("bij,bjd->bid", attn, vv)
    Hq, Wq = q.shape[2], q.shape[3]
    o = (o.reshape(B, heads, Hq * Wq, dim_head)
          .transpose(0, 1, 3, 2)
          .reshape(B, inner, Hq, Wq))
    return (jnp.einsum("bchw,co->bohw", o, params["out_w"])
            + params["out_b"][None, :, None, None])


if __name__ == "__main__":
    B, C, H, W = 2, 16, 8, 8
    heads, dim_head = 2, 8
    proj_kernel, kv_proj_stride = 3, 2

    x = jax.random.normal(jax.random.PRNGKey(0), (B, C, H, W), jnp.float32)
    params = init_params(C, heads, dim_head, proj_kernel)

    out = attention_forward(x, params, heads=heads, dim_head=dim_head,
                            proj_kernel=proj_kernel, kv_proj_stride=kv_proj_stride)
    out = jax.block_until_ready(out)

    ref = ref_forward(x, params, heads=heads, dim_head=dim_head,
                      proj_kernel=proj_kernel, kv_proj_stride=kv_proj_stride)

    assert out.shape == (B, C, H, W), out.shape
    # bf16 MXU operands + approx reciprocal -> relaxed tolerance vs. pure-f32 ref.
    assert bool(jnp.allclose(out, ref, rtol=2e-2, atol=2e-2)), "mismatch vs reference"
    print("KERNEL_OK")
</pallas_src>

<mosaic_0001>
module attributes {stable_mosaic.version = 11 : i64} {
  func.func @_token_proj_kernel(%arg0: i32, %arg1: i32, %arg2: memref<1x144x64xbf16, #tpu.memory_space<vmem>>, %arg3: memref<16x144xbf16, #tpu.memory_space<vmem>>, %arg4: memref<16x1xf32, #tpu.memory_space<vmem>>, %arg5: memref<1x16x64xbf16, #tpu.memory_space<vmem>>) attributes {dimension_semantics = [#tpu.dimension_semantics<parallel>, #tpu.dimension_semantics<parallel>], iteration_bounds = array<i64: 2, 1>, scalar_prefetch = 0 : i64, scratch_operands = 0 : i64, tpu.core_type = #tpu.core_type<tc>, window_params = [{transform_indices = @transform_0, window_bounds = array<i64: 1, 144, 64>}, {pipeline_mode = #tpu.pipeline_mode<synchronous>, transform_indices = @transform_1, window_bounds = array<i64: 16, 144>}, {pipeline_mode = #tpu.pipeline_mode<synchronous>, transform_indices = @transform_2, window_bounds = array<i64: 16, 1>}, {transform_indices = @transform_3, window_bounds = array<i64: 1, 16, 64>}]} {
    %c0 = arith.constant 0 : index
    %c0_0 = arith.constant 0 : index
    %0 = vector.load %arg3[%c0, %c0_0] : memref<16x144xbf16, #tpu.memory_space<vmem>>, vector<16x144xbf16>
    %c0_1 = arith.constant 0 : index
    %c0_2 = arith.constant 0 : index
    %c0_3 = arith.constant 0 : index
    %1 = vector.load %arg2[%c0_1, %c0_2, %c0_3] : memref<1x144x64xbf16, #tpu.memory_space<vmem>>, vector<1x144x64xbf16>
    %2 = vector.shape_cast %1 : vector<1x144x64xbf16> to vector<144x64xbf16>
    %cst = arith.constant dense<0.000000e+00> : vector<16x64xf32>
    %3 = tpu.matmul %0, %2, %cst {dimension_numbers = #tpu.dot_dimension_numbers<[1], [0], [0], [1], [0, 0, 1, 1], [], []>} : vector<16x144xbf16>, vector<144x64xbf16>, vector<16x64xf32> -> vector<16x64xf32>
    %c0_4 = arith.constant 0 : index
    %c0_5 = arith.constant 0 : index
    %4 = vector.load %arg4[%c0_4, %c0_5] : memref<16x1xf32, #tpu.memory_space<vmem>>, vector<16x1xf32>
    %5 = vector.broadcast %4 : vector<16x1xf32> to vector<16x64xf32>
    %6 = arith.addf %3, %5 : vector<16x64xf32>
    %7 = arith.truncf %6 : vector<16x64xf32> to vector<16x64xbf16>
    %c0_6 = arith.constant 0 : index
    %c0_7 = arith.constant 0 : index
    %c0_8 = arith.constant 0 : index
    %8 = vector.load %arg5[%c0_6, %c0_7, %c0_8] : memref<1x16x64xbf16, #tpu.memory_space<vmem>>, vector<1x16x64xbf16>
    %9 = vector.shape_cast %8 : vector<1x16x64xbf16> to vector<16x64xbf16>
    %10 = vector.shape_cast %7 : vector<16x64xbf16> to vector<1x16x64xbf16>
    tpu.vector_store %arg5[%c0_6, %c0_7, %c0_8], %10 {strides = array<i32>} : memref<1x16x64xbf16, #tpu.memory_space<vmem>>, vector<1x16x64xbf16>,
    return
  }
  func.func @transform_0(%arg0: i32, %arg1: i32) -> (i32, i32, i32) {
    %c0_i32 = arith.constant 0 : i32
    %c0_i32_0 = arith.constant 0 : i32
    return %arg0, %c0_i32, %arg1 : i32, i32, i32
  }
  func.func @transform_1(%arg0: i32, %arg1: i32) -> (i32, i32) {
    %c0_i32 = arith.constant 0 : i32
    %c0_i32_0 = arith.constant 0 : i32
    %c0_i32_1 = arith.constant 0 : i32
    return %c0_i32, %c0_i32_0 : i32, i32
  }
  func.func @transform_2(%arg0: i32, %arg1: i32) -> (i32, i32) {
    %c0_i32 = arith.constant 0 : i32
    %c0_i32_0 = arith.constant 0 : i32
    %c0_i32_1 = arith.constant 0 : i32
    return %c0_i32, %c0_i32_0 : i32, i32
  }
  func.func @transform_3(%arg0: i32, %arg1: i32) -> (i32, i32, i32) {
    %c0_i32 = arith.constant 0 : i32
    %c0_i32_0 = arith.constant 0 : i32
    return %arg0, %c0_i32, %arg1 : i32, i32, i32
  }
}

</mosaic_0001>

<llo_original>
// kernel: tpu_custom_call.1
$region0: #{tpu_custom_call.1}
  #allocation0 [shape = 'u32[]', space=smem, size = 0x4, offset = 0x4, fixed_abs, tag = 'smem constant byte address 0x4 - core index']
  #allocation1 [shape = 'u32[72,128]{1,0:T(1,128)}', space=vmem, size = 0x9000, scoped, tag = 'internal scratch']
  %s0 = inlined_call_operand.vmem [shape: bf16[2,144,64], index: 0, kind: input, shape index: {}]
  %s1 = inlined_call_operand.vmem [shape: bf16[16,144], index: 1, kind: input, shape index: {}]
  %s2 = inlined_call_operand.vmem [shape: f32[16,1], index: 2, kind: input, shape index: {}]
  %s3 = inlined_call_operand.hbm [shape: bf16[2,16,64], index: 3, kind: output, shape index: {}]
  %s4 = sld [smem:[#allocation0]]
  $region45: #{tpu_custom_call.1} parent=0
    _
  %s6 = ssub.s32 1, %s4
  %s7 = scalar_select 0, %s6, %s4
  $region1: #{tpu_custom_call.1} parent=0
    #allocation2 [shape = 'u8[8192]{0}', space=vmem, size = 0x2000, scoped, tag = 'output window, operand 0']
    #allocation3 [shape = 's32[2]{0}', space=sflag, size = 0x8, scoped, tag = 'scoped memory for tpu_custom_call.1']
    %8 = vsyncpa [#allocation3], 0
    %s9 = scalar_lea.sflag [#allocation3], 1
    %10 = vsyncpa %s9, 0
    loop: start=0, step=1, limit=4
    $region2: #{tpu_custom_call.1} parent=1 // loop_pre_header
      _
    $region3: #{tpu_custom_call.1} parent=1 // loop_header
      %s12 = sphi 0, %s16
      %p13 = scmp.ge.s32.totalorder %s12, 4
      %s19 = sphi 0, %s31
      %s20 = sphi 0, %s27
      %s21 = sphi 0, %s19
      %s22 = sphi 0, %s20
      %s23 = sphi 0, %s21
      %s24 = sphi 0, %s22
      %s36 = sphi 0, %s38
      %s39 = sphi 0, %s36
      %s40 = sphi 0, %s39
      %s56 = sphi 0, %s40
      %s60 = sphi 0, %s60
      %s62 = sphi 0, %s60
      %s63 = sphi 0, %s62
      %s77 = sphi 0, %s63
      %s81 = sphi 0, %s81
      %s83 = sphi 0, %s81
      %s84 = sphi 0, %s83
      %s98 = sphi 0, %s84
      %s106 = sphi 0, %s108
      %s109 = sphi 0, %s106
      %s110 = sphi 0, %s109
      %s126 = sphi 0, %s110
    $region4: #{tpu_custom_call.1} parent=1 // loop_header_branch
      %15 = sbr.rel (%p13) target = $region8
    $region5: #{tpu_custom_call.1} parent=1 // loop_body
      %s17 = ssub.s32 %s12, 1
      %s18 = ssub.s32 %s12, 2
      %s25 = sadd.s32 1, %s20
      %p26 = scmp.ge.s32.totalorder %s25, 1
      %s27 = scalar_select %p26, 0, %s25
      %s28 = sadd.s32 1, %s19
      %s29 = scalar_select %p26, %s28, %s19
      %p30 = scmp.ge.s32.totalorder %s29, 2
      %s31 = scalar_select %p30, 0, %s29
      %s32 = ssub.s32 %s19, %s31
      %s33 = ssub.s32 %s20, %s27
      %s34 = sor.u32 %s32, %s33
      %p35 = scmp.eq.s32.totalorder %s34, 0
      %s37 = sadd.s32 %s36, 1
      %s38 = scalar_select %p35, %s36, %s37
      %p41 = pneg %p35
      %p42 = scmp.eq.s32.totalorder %s12, 1
      %p43 = por %p41, %p42
      %p44 = scmp.ne.s32.totalorder %s36, %s39
      %p45 = scmp.eq.s32.totalorder %s12, 0
      %p46 = por %p44, %p45
      %p47 = scmp.ne.s32.totalorder %s36, %s39
      %p48 = scmp.eq.s32.totalorder %s17, 1
      %p49 = por %p47, %p48
      %p50 = scmp.ne.s32.totalorder %s39, %s40
      %p51 = scmp.eq.s32.totalorder %s17, 0
      %p52 = por %p50, %p51
      %p53 = scmp.ne.s32.totalorder %s39, %s40
      %p54 = scmp.eq.s32.totalorder %s18, 1
      %p55 = por %p53, %p54
      %p57 = scmp.ne.s32.totalorder %s40, %s56
      %p58 = scmp.eq.s32.totalorder %s18, 0
      %p59 = por %p57, %p58
      %s61 = sadd.s32 %s60, 1
      %p64 = scmp.eq.s32.totalorder %s12, 1
      %p65 = scmp.ne.s32.totalorder %s60, %s62
      %p66 = scmp.eq.s32.totalorder %s12, 0
      %p67 = por %p65, %p66
      %p68 = scmp.ne.s32.totalorder %s60, %s62
      %p69 = scmp.eq.s32.totalorder %s17, 1
      %p70 = por %p68, %p69
      %p71 = scmp.ne.s32.totalorder %s62, %s63
      %p72 = scmp.eq.s32.totalorder %s17, 0
      %p73 = por %p71, %p72
      %p74 = scmp.ne.s32.totalorder %s62, %s63
      %p75 = scmp.eq.s32.totalorder %s18, 1
      %p76 = por %p74, %p75
      %p78 = scmp.ne.s32.totalorder %s63, %s77
      %p79 = scmp.eq.s32.totalorder %s18, 0
      %p80 = por %p78, %p79
      %s82 = sadd.s32 %s81, 1
      %p85 = scmp.eq.s32.totalorder %s12, 1
      %p86 = scmp.ne.s32.totalorder %s81, %s83
      %p87 = scmp.eq.s32.totalorder %s12, 0
      %p88 = por %p86, %p87
      %p89 = scmp.ne.s32.totalorder %s81, %s83
      %p90 = scmp.eq.s32.totalorder %s17, 1
      %p91 = por %p89, %p90
      %p92 = scmp.ne.s32.totalorder %s83, %s84
      %p93 = scmp.eq.s32.totalorder %s17, 0
      %p94 = por %p92, %p93
      %p95 = scmp.ne.s32.totalorder %s83, %s84
      %p96 = scmp.eq.s32.totalorder %s18, 1
      %p97 = por %p95, %p96
      %p99 = scmp.ne.s32.totalorder %s84, %s98
      %p100 = scmp.eq.s32.totalorder %s18, 0
      %p101 = por %p99, %p100
      %s102 = ssub.s32 %s19, %s31
      %s103 = ssub.s32 %s20, %s27
      %s104 = sor.u32 %s102, %s103
      %p105 = scmp.eq.s32.totalorder %s104, 0
      %s107 = sadd.s32 %s106, 1
      %s108 = scalar_select %p105, %s106, %s107
      %p111 = pneg %p105
      %p112 = scmp.eq.s32.totalorder %s12, 1
      %p113 = por %p111, %p112
      %p114 = scmp.ne.s32.totalorder %s106, %s109
      %p115 = scmp.eq.s32.totalorder %s12, 0
      %p116 = por %p114, %p115
      %p117 = scmp.ne.s32.totalorder %s106, %s109
      %p118 = scmp.eq.s32.totalorder %s17, 1
      %p119 = por %p117, %p118
      %p120 = scmp.ne.s32.totalorder %s109, %s110
      %p121 = scmp.eq.s32.totalorder %s17, 0
      %p122 = por %p120, %p121
      %p123 = scmp.ne.s32.totalorder %s109, %s110
      %p124 = scmp.eq.s32.totalorder %s18, 1
      %p125 = por %p123, %p124
      %p127 = scmp.ne.s32.totalorder %s110, %s126
      %p128 = scmp.eq.s32.totalorder %s18, 0
      %p129 = por %p127, %p128
      %p130 = scmp.le.s32.totalorder 1, %s12
      %p131 = scmp.lt.s32.totalorder %s12, 3
      %p132 = pnand %p130, %p131
      %p133 = pneg %p132
      // Predicated region
      $region9: #{tpu_custom_call.1} parent=5 // pred_check
        _
      $region10: #{tpu_custom_call.1} parent=5 // pred_check_branch
        %135 = sbr.rel (%p132) target = $region12
      $region11: #{tpu_custom_call.1} parent=5 // pred_region
        %s136 = ssub.s32 %s12, 1
        // Predicated region
        $region13: #{tpu_custom_call.1} parent=11 // pred_check
          %p137 = pneg %p73
        $region14: #{tpu_custom_call.1} parent=11 // pred_check_branch
          %139 = sbr.rel (%p137) target = $region16
        $region15: #{tpu_custom_call.1} parent=11 // pred_region
          _
        $region16: #{tpu_custom_call.1} parent=11 // pred_fallthru
          _
        // Predicated region
        $region17: #{tpu_custom_call.1} parent=11 // pred_check
          %p140 = pneg %p94
        $region18: #{tpu_custom_call.1} parent=11 // pred_check_branch
          %142 = sbr.rel (%p140) target = $region20
        $region19: #{tpu_custom_call.1} parent=11 // pred_region
          _
        $region20: #{tpu_custom_call.1} parent=11 // pred_fallthru
          _
      $region12: #{tpu_custom_call.1} parent=5 // pred_fallthru
        _
      %p143 = scmp.lt.s32.totalorder %s12, 2
      // Predicated region
      $region21: #{tpu_custom_call.1} parent=5 // pred_check
        %p144 = pneg %p143
      $region22: #{tpu_custom_call.1} parent=5 // pred_check_branch
        %146 = sbr.rel (%p144) target = $region24
      $region23: #{tpu_custom_call.1} parent=5 // pred_region
        // Predicated region
        $region25: #{tpu_custom_call.1} parent=23 // pred_check
          %p147 = pneg %p46
        $region26: #{tpu_custom_call.1} parent=23 // pred_check_branch
          %149 = sbr.rel (%p147) target = $region28
        $region27: #{tpu_custom_call.1} parent=23 // pred_region
          %p150 = scmp.lt.s32.totalorder %s19, 1
          %s151 = scalar_select %p150, %s19, 1
          %p152 = scmp.lt.s32.totalorder %s20, 0
          %s153 = scalar_select %p152, %s20, 0
          %s154 = smul.addr %s151, 18
          %s155 = sadd.s32 %s153, %s154
          %s156 = smul.addr %s155, 4
          %s157 = scalar_lea.vmem %s0, %s156
        $region28: #{tpu_custom_call.1} parent=23 // pred_fallthru
          _
      $region24: #{tpu_custom_call.1} parent=5 // pred_fallthru
        _
      %p158 = scmp.le.s32.totalorder 1, %s12
      %p159 = scmp.lt.s32.totalorder %s12, 3
      %p160 = pnand %p158, %p159
      %p161 = pneg %p160
      // Predicated region
      $region29: #{tpu_custom_call.1} parent=5 // pred_check
        _
      $region30: #{tpu_custom_call.1} parent=5 // pred_check_branch
        %163 = sbr.rel (%p160) target = $region32
      $region31: #{tpu_custom_call.1} parent=5 // pred_region
        %s164 = ssub.s32 %s12, 1
        %p165 = scmp.lt.s32.totalorder %s21, 1
        %s166 = scalar_select %p165, %s21, 1
        %p167 = scmp.lt.s32.totalorder %s22, 0
        %s168 = scalar_select %p167, %s22, 0
        %s169 = smul.addr %s166, 18
        %s170 = sadd.s32 %s168, %s169
        %s171 = smul.addr %s170, 4
        %s172 = scalar_lea.vmem %s0, %s171
        %p173 = pneg %p52
        %p174 = pneg %p49
        %p175 = pneg %p73
        %p176 = pneg %p70
        %p177 = pneg %p94
        %p178 = pneg %p91
        %p179 = pneg %p122
        %p180 = pneg %p119
        %s181 = sand.u32 %s109, 1
        %s182 = scalar_lea.sflag [#allocation3], %s181
        %s183 = sand.u32 %s109, 1
        %s184 = smul.addr %s183, 8
        %s185 = scalar_lea.vmem [#allocation2], %s184
        %p186 = scmp.lt.s32.totalorder %s21, 1
        %s187 = scalar_select %p186, %s21, 1
        %p188 = scmp.lt.s32.totalorder %s22, 0
        %s189 = scalar_select %p188, %s22, 0
        %s190 = smul.addr %s187, 18
        %s191 = sadd.s32 %s189, %s190
        %s192 = smul.addr %s191, 4
        %s193 = scalar_lea.vmem %s0, %s192
        %v195 = vld [vmem:[%s1] sm:$0xff]
        %v196 = vld [vmem:[%s1 + $0x8] sm:$0xff]
        %v197 = vld [vmem:[%s193] sm:$0xf]
        %v198 = vld [vmem:[%s193 + $0x4] sm:$0xf]
        %v199 = vld [vmem:[%s193 + $0x8] sm:$0xf]
        %v200 = vld [vmem:[%s193 + $0xc] sm:$0xf]
        %v201 = vld [vmem:[%s193 + $0x10] sm:$0xf]
        %v202 = vld [vmem:[%s193 + $0x14] sm:$0xf]
        %v203 = vld [vmem:[%s193 + $0x18] sm:$0xf]
        %v204 = vld [vmem:[%s193 + $0x1c] sm:$0xf]
        %v205 = vld [vmem:[%s193 + $0x20] sm:$0xf]
        %v206 = vld [vmem:[%s193 + $0x24] sm:$0xf]
        %v207 = vld [vmem:[%s193 + $0x28] sm:$0xf]
        %v208 = vld [vmem:[%s193 + $0x2c] sm:$0xf]
        %v209 = vld [vmem:[%s193 + $0x30] sm:$0xf]
        %v210 = vld [vmem:[%s193 + $0x34] sm:$0xf]
        %v211 = vld [vmem:[%s193 + $0x38] sm:$0xf]
        %v212 = vld [vmem:[%s193 + $0x3c] sm:$0xf]
        %v213 = vld [vmem:[%s193 + $0x40] sm:$0xf]
        %v214 = vld [vmem:[%s193 + $0x44] sm:$0xf]
        %v215 = vld [vmem:[%s2] sm:$0xff]
        %v216 = vld [vmem:[%s2 + $0x8] sm:$0xff]
        %218 = vset.pattern.permute.xlu0 0
        %219 = vperm.xlu0 %218, %v215
        %v220 = vpop.permute.xlu0 %219
        %223 = vset.pattern.permute.xlu0 0
        %224 = vperm.xlu0 %223, %v216
        %v225 = vpop.permute.xlu0 %224
        %v229 = vunpack.c.l.b16 %v195
        %v230 = vunpack.c.h.b16 %v195
        %v231 = vunpack.c.l.b16 %v196
        %v232 = vunpack.c.h.b16 %v196
        %v233 = vpack.c.b16 %v231, %v229
        %v234 = vpack.c.b16 %v232, %v230
        %v254 = vunpack.c.l.b16 %v197
        %v255 = vunpack.c.l.b16 %v198
        %v256 = vunpack.c.l.b16 %v199
        %v257 = vunpack.c.l.b16 %v200
        %v258 = vunpack.c.l.b16 %v201
        %v259 = vunpack.c.l.b16 %v202
        %v260 = vunpack.c.l.b16 %v203
        %v261 = vunpack.c.l.b16 %v204
        %v262 = vunpack.c.l.b16 %v205
        %v263 = vunpack.c.l.b16 %v206
        %v264 = vunpack.c.l.b16 %v207
        %v265 = vunpack.c.l.b16 %v208
        %v266 = vunpack.c.l.b16 %v209
        %v267 = vunpack.c.l.b16 %v210
        %v268 = vunpack.c.l.b16 %v211
        %v269 = vunpack.c.l.b16 %v212
        %v270 = vunpack.c.l.b16 %v213
        %v271 = vunpack.c.l.b16 %v214
        %v272 = vpack.c.b16 %v255, %v254
        %v273 = vpack.c.b16 %v257, %v256
        %v274 = vpack.c.b16 %v259, %v258
        %v275 = vpack.c.b16 %v261, %v260
        %v276 = vpack.c.b16 %v263, %v262
        %v277 = vpack.c.b16 %v265, %v264
        %v278 = vpack.c.b16 %v267, %v266
        %v279 = vpack.c.b16 %v269, %v268
        %v280 = vpack.c.b16 %v271, %v270
        %vm290 = vcmask 130048
        %v292 = vsel %vm290, %v234, 0
        %294 = vmatpush.bf16.msra.mxu0 %v279
        %295 = vmatpush.bf16.msra.mxu0 %v278
        %296 = vmatpush.bf16.msra.mxu0 %v277
        %297 = vmatpush.bf16.msra.mxu0 %v276
        %298 = vmatpush.bf16.msra.mxu0 %v275
        %299 = vmatpush.bf16.msra.mxu0 %v274
        %300 = vmatpush.bf16.msra.mxu0 %v273
        %301 = vmatpush.bf16.msra.mxu0 %v272
        %302 = vmatmul.bf16.gmra.mxu0 %v233
        %v303 = vpop.f32.mrf.mxu0
        %v304 = vadd.f32 %v220, %v303
        %v305 = vpop.f32.mrf.mxu0
        %v306 = vadd.f32 %v225, %v305
        %307 = vdwg.mxu0
        %308 = vmatpush.bf16.msra.mxu0 0
        %309 = vmatpush.bf16.msra.mxu0 0
        %310 = vmatpush.bf16.msra.mxu0 0
        %311 = vmatpush.bf16.msra.mxu0 0
        %312 = vmatpush.bf16.msra.mxu0 0
        %313 = vmatpush.bf16.msra.mxu0 0
        %314 = vmatpush.bf16.msra.mxu0 0
        %315 = vmatpush.bf16.msra.mxu0 %v280
        %316 = vmatmul.bf16.gmra.mxu0 %v292
        %v317 = vpop.f32.mrf.mxu0
        %v318 = vadd.f32 %v304, %v317
        %v319 = vpop.f32.mrf.mxu0
        %v320 = vadd.f32 %v306, %v319
        %321 = vdwg.mxu0
        %v322 = vpack.c.bf16 %v318, %v318
        %v323 = vpack.c.bf16 %v320, %v320
        %vm324 = vcmask 519168
        %325 = vst.msk [vmem:[%s185] sm:$0xf] %vm324, %v322
        %326 = vst.msk [vmem:[%s185 + $0x4] sm:$0xf] %vm324, %v323
        %s327 = sand.u32 %s109, 1
        %s328 = scalar_lea.sflag [#allocation3], %s327
        %s329 = sand.u32 %s109, 1
        %s330 = smul.addr %s329, 8
        %s331 = scalar_lea.vmem [#allocation2], %s330
        // Predicated region
        $region33: #{tpu_custom_call.1} parent=31 // pred_check
          %p332 = pneg %p119
        $region34: #{tpu_custom_call.1} parent=31 // pred_check_branch
          %334 = sbr.rel (%p332) target = $region36
        $region35: #{tpu_custom_call.1} parent=31 // pred_region
          %336 = vsyncadd %s328, 0
          %s337 = smul.addr %s21, 2
          %s338 = sadd.s32 %s22, %s337
          %s339 = smul.addr %s338, 4
          %s340 = scalar_lea.hbm %s3, %s339
          %s341 = sshll.u32 %s331, 4
          %s342 = int_to_ptr.vmem [resolvable:$true] %s341
          %s343 = sshll.u32 %s340, 4
          %s344 = int_to_ptr.hbm [resolvable:$true] %s343
          %349 = dma.vmem_to_hbm [thread:$0]  %s342, 128, %s344, %s328, 64, 64, 4
        $region36: #{tpu_custom_call.1} parent=31 // pred_fallthru
          _
      $region32: #{tpu_custom_call.1} parent=5 // pred_fallthru
        _
      %p350 = scmp.le.s32.totalorder 2, %s12
      // Predicated region
      $region37: #{tpu_custom_call.1} parent=5 // pred_check
        %p351 = pneg %p350
      $region38: #{tpu_custom_call.1} parent=5 // pred_check_branch
        %353 = sbr.rel (%p351) target = $region40
      $region39: #{tpu_custom_call.1} parent=5 // pred_region
        %s354 = ssub.s32 %s12, 2
        // Predicated region
        $region41: #{tpu_custom_call.1} parent=39 // pred_check
          %p355 = pneg %p125
        $region42: #{tpu_custom_call.1} parent=39 // pred_check_branch
          %357 = sbr.rel (%p355) target = $region44
        $region43: #{tpu_custom_call.1} parent=39 // pred_region
          %s358 = sand.u32 %s110, 1
          %s359 = scalar_lea.sflag [#allocation3], %s358
          %s360 = sand.u32 %s110, 1
          %s361 = smul.addr %s360, 8
          %s362 = scalar_lea.vmem [#allocation2], %s361
          %364 = dma.done %s359, 128
        $region44: #{tpu_custom_call.1} parent=39 // pred_fallthru
          _
      $region40: #{tpu_custom_call.1} parent=5 // pred_fallthru
        _
    $region6: #{tpu_custom_call.1} parent=1 // loop_footer
      %s16 = sadd.s32 1, %s12
    $region7: #{tpu_custom_call.1} parent=1 // loop_footer_branch
      %11 = sbr.rel target = $region3
    $region8: #{tpu_custom_call.1} parent=1 // loop_exit
      _
    %365 = vsyncpa [#allocation3], 1
    %s366 = scalar_lea.sflag [#allocation3], 1
    %367 = vsyncpa %s366, 1

</llo_original>
